<compile_context>
chip_gen: v7x
topology: tpu7x:2x2x1
jax: 0.10.0
libtpu: 0.0.40
codegen_flags: <defaults>
</compile_context>

<pallas_src>
import functools

import numpy as np
import jax
import jax.numpy as jnp
from jax import lax
from jax.experimental import pallas as pl
from jax.experimental.pallas import tpu as pltpu


def _bilinear_upsample_matrix(n_in, n_out):
    """1-D bilinear interpolation matrix (n_out, n_in) matching PyTorch
    nn.Upsample(mode='bilinear', align_corners=False): half-pixel centers, source
    coordinate clamped at 0, indices clamped at n_in - 1."""
    A = np.zeros((n_out, n_in), np.float32)
    scale = n_in / n_out
    for o in range(n_out):
        src = max((o + 0.5) * scale - 0.5, 0.0)
        i0 = min(int(np.floor(src)), n_in - 1)
        i1 = min(i0 + 1, n_in - 1)
        lam = src - i0
        A[o, i0] += 1.0 - lam
        A[o, i1] += lam
    return A


def pick_images_per_block(B):
    """Images per grid step.  Tiny batches: one big step (amortize grid overhead).
    Larger even batches: two 'parallel' steps so v7x's two TensorCores each get half."""
    return B // 2 if (B >= 4 and B % 2 == 0) else B


def build_upsampler_params(weight, H, W, BB):
    """Host-side (NumPy) fold of bilinear-x2 upsample + conv zero-pad + 3x3 conv +
    PixelShuffle(2) into two bf16 matrices.  Build once per weight; reuse across calls.

    weight: (3, 3, Cin, Cout) cross-correlation kernel (ky, kx, Cin, Cout), Cout % 4 == 0.
    Returns:
      m_cat: (Cin*W, 3*Q) bf16 with Q = 2*W*Cout; columns ordered (ky, cf, di, s, dj).
             Horizontal upsample + pad + the 3 horizontal taps + Cin->Cout channel mix
             + the PixelShuffle lane permutation, one Q-wide block per vertical tap ky.
      a_big: (BB*2H, 3*BB*H) bf16, block-diagonal over the BB images of one grid step;
             columns ordered (ky, image, h), rows (image, r).  Vertical upsample + pad
             + the 3 vertical taps, already shifted so the kernel never needs a
             sublane-offset slice.
    """
    w = np.asarray(weight, np.float32)
    assert w.shape[0] == 3 and w.shape[1] == 3
    Cin, Cout = w.shape[2], w.shape[3]
    assert Cout % 4 == 0 and Cout >= 4, "PixelShuffle(2) needs Cout divisible by 4"
    Cf = Cout // 4
    H2, W2 = 2 * H, 2 * W

    A_h = _bilinear_upsample_matrix(H, H2)                              # (2H, H)
    A_w = _bilinear_upsample_matrix(W, W2)                              # (2W, W)
    A_hp = np.zeros((H2 + 2, H), np.float32); A_hp[1:H2 + 1] = A_h      # + conv v-pad
    A_wp = np.zeros((W2 + 2, W), np.float32); A_wp[1:W2 + 1] = A_w      # + conv h-pad

    # --- horizontal fold: S[kx, s, w] = A_wp[s + kx, w] ---
    S = np.stack([A_wp[kx:kx + W2] for kx in range(3)], axis=0)         # (3, 2W, W)
    w6 = w.reshape(3, 3, Cin, Cf, 2, 2)                                 # (ky,kx,ci,cf,di,dj)
    # M[ky, ci, w, cf, di, s, dj] = sum_kx w6[ky,kx,ci,cf,di,dj] * S[kx, s, w]
    M = np.einsum('abcfij,bsw->acwfisj', w6, S)
    Q = Cf * 2 * W2 * 2                                                 # = 2*W*Cout
    M = M.reshape(3, Cin * W, Q)
    m_cat = np.ascontiguousarray(M.transpose(1, 0, 2).reshape(Cin * W, 3 * Q))

    # --- vertical fold: pre-shifted taps, block-diagonal over the BB images ---
    A_shift = np.stack([A_hp[ky:ky + H2] for ky in range(3)], axis=0)   # (3, 2H, H)
    a_big = np.zeros((BB * H2, 3, BB, H), np.float32)
    for b in range(BB):
        a_big[b * H2:(b + 1) * H2, :, b, :] = A_shift.transpose(1, 0, 2)
    a_big = a_big.reshape(BB * H2, 3 * BB * H)

    return (jnp.asarray(m_cat, jnp.bfloat16), jnp.asarray(a_big, jnp.bfloat16))


def _upsampler_kernel(x_ref, m_ref, a_ref, o_ref, *, BB, H2, Q, Cf, lanes_per_cf):
    # Stage A: horizontal upsample + pad + horizontal taps + channel mix (+ pixel
    # shuffle lane order) for all three vertical taps at once -- one bf16 MXU matmul
    # with BB*H rows.
    z = jnp.dot(x_ref[...], m_ref[...],
                preferred_element_type=jnp.float32).astype(jnp.bfloat16)   # (BB*H, 3Q)
    # Move the three vertical-tap groups from lanes (Q-aligned slices) onto sublanes
    # so stage B is a single matmul with rows ordered (ky, image, h).
    z_stack = jnp.concatenate([z[:, a * Q:(a + 1) * Q] for a in range(3)],
                              axis=0)                                       # (3*BB*H, Q)
    # Stage B: vertical upsample + pad + vertical taps for all BB images in one matmul
    # against the pre-shifted block-diagonal A (no sublane-offset slices anywhere).
    y = jnp.dot(a_ref[...], z_stack, preferred_element_type=jnp.float32)    # (BB*2H, Q)
    yb = y.reshape(BB, H2, Q)
    # PixelShuffle already lives in the lane order (cf, di, s, dj): emit one lane-dense
    # (2H, 8W) slab per output channel (full 128-lane stores when W % 16 == 0); the
    # wrapper only reshapes.
    for cf in range(Cf):
        o_ref[:, cf, :, :] = yb[:, :, cf * lanes_per_cf:(cf + 1) * lanes_per_cf]


@jax.jit
def upsampler_forward(x, m_cat, a_big):
    """x: (B, Cin, H, W) float32.  m_cat/a_big: from build_upsampler_params.
    Returns (B, Cout//4, 4H, 4W) = PixelShuffle(2)(Conv3x3(Upsample2x_bilinear(x)))."""
    B, Cin, H, W = x.shape
    K, Q3 = m_cat.shape
    assert K == Cin * W
    Q = Q3 // 3
    W8 = 8 * W
    Cf = Q // W8
    H2 = 2 * H
    BB = a_big.shape[0] // H2
    assert B % BB == 0, "batch must be a multiple of the images-per-block used in build"
    n_blocks = B // BB

    # Lane layout for the channel-mix matmul: rows (b, h), lanes (ci, w).  Only the two
    # major dims (Cin, H) swap; W stays minor, so this is a cheap major-dim permute
    # (noise at these sizes; fold into the producer at production sizes).
    x_flat = jnp.transpose(x.astype(jnp.bfloat16), (0, 2, 1, 3)).reshape(B * H, Cin * W)

    y = pl.pallas_call(
        functools.partial(_upsampler_kernel, BB=BB, H2=H2, Q=Q, Cf=Cf, lanes_per_cf=W8),
        out_shape=jax.ShapeDtypeStruct((B, Cf, H2, W8), jnp.float32),
        grid_spec=pltpu.PrefetchScalarGridSpec(
            num_scalar_prefetch=0,
            grid=(n_blocks,),
            in_specs=[
                pl.BlockSpec((BB * H, Cin * W), lambda i: (i, 0)),
                pl.BlockSpec((Cin * W, 3 * Q), lambda i: (0, 0)),       # weight-resident
                pl.BlockSpec((BB * H2, 3 * BB * H), lambda i: (0, 0)),  # weight-resident
            ],
            out_specs=pl.BlockSpec((BB, Cf, H2, W8), lambda i: (i, 0, 0, 0)),
        ),
        compiler_params=pltpu.CompilerParams(
            dimension_semantics=("parallel",),
            vmem_limit_bytes=32 * 1024 * 1024,
        ),
    )(x_flat, m_cat, a_big)

    # PixelShuffle(2) finale is a pure reshape: rows (r, di) -> 4H, lanes (s, dj) -> 4W
    # were already interleaved by the folded M column ordering.
    return y.reshape(B, Cf, 4 * H, 4 * W)


def _reference_forward(x_nchw, weight):
    """Pure-JAX reference: explicit bilinear-x2 (same torch semantics), XLA conv,
    standard PixelShuffle reshuffle.  Independent of the folded-matrix kernel path."""
    B, Cin, H, W = x_nchw.shape
    Cout = weight.shape[-1]
    Cf = Cout // 4
    A_h = jnp.asarray(_bilinear_upsample_matrix(H, 2 * H))
    A_w = jnp.asarray(_bilinear_upsample_matrix(W, 2 * W))
    x_nhwc = jnp.transpose(x_nchw, (0, 2, 3, 1)).astype(jnp.float32)
    u = jnp.einsum('rh,bhwc->brwc', A_h, x_nhwc)
    u = jnp.einsum('sw,brwc->brsc', A_w, u)
    y = lax.conv_general_dilated(u, weight.astype(jnp.float32), (1, 1),
                                 ((1, 1), (1, 1)),
                                 dimension_numbers=('NHWC', 'HWIO', 'NHWC'))
    y = jnp.transpose(y, (0, 3, 1, 2))                          # (B, Cout, 2H, 2W)
    y = y.reshape(B, Cf, 2, 2, 2 * H, 2 * W)
    y = jnp.transpose(y, (0, 1, 4, 2, 5, 3))
    return y.reshape(B, Cf, 4 * H, 4 * W)


if __name__ == "__main__":
    key = jax.random.PRNGKey(0)
    kx_, kw_ = jax.random.split(key)

    B, Cin, Cout, H, W = 2, 4, 8, 16, 16     # Cout % 4 == 0 for PixelShuffle(2)
    x = jax.random.normal(kx_, (B, Cin, H, W), jnp.float32)
    w = jax.random.normal(kw_, (3, 3, Cin, Cout), jnp.float32) / np.sqrt(9.0 * Cin)

    # Fold the conv weight once on the host; reuse across forward calls.
    BB = pick_images_per_block(B)
    m_cat, a_big = build_upsampler_params(np.asarray(w), H, W, BB)

    out = upsampler_forward(x, m_cat, a_big)
    jax.block_until_ready(out)
    assert out.shape == (B, Cout // 4, 4 * H, 4 * W)

    ref = _reference_forward(x, w)
    err = float(jnp.max(jnp.abs(out - ref)))
    assert err < 5e-2, f"mismatch vs reference: max abs err = {err}"   # bf16 operands
    print("KERNEL_OK")
</pallas_src>

<mosaic_0001>
module attributes {stable_mosaic.version = 11 : i64} {
  func.func @_upsampler_kernel(%arg0: i32, %arg1: memref<32x64xbf16, #tpu.memory_space<vmem>>, %arg2: memref<64x768xbf16, #tpu.memory_space<vmem>>, %arg3: memref<64x96xbf16, #tpu.memory_space<vmem>>, %arg4: memref<2x2x32x128xf32, #tpu.memory_space<vmem>>) attributes {dimension_semantics = [#tpu.dimension_semantics<parallel>], iteration_bounds = array<i64: 1>, scalar_prefetch = 0 : i64, scratch_operands = 0 : i64, tpu.core_type = #tpu.core_type<tc>, window_params = [{transform_indices = @transform_0, window_bounds = array<i64: 32, 64>}, {pipeline_mode = #tpu.pipeline_mode<synchronous>, transform_indices = @transform_1, window_bounds = array<i64: 64, 768>}, {pipeline_mode = #tpu.pipeline_mode<synchronous>, transform_indices = @transform_2, window_bounds = array<i64: 64, 96>}, {transform_indices = @transform_3, window_bounds = array<i64: 2, 2, 32, 128>}]} {
    %c0 = arith.constant 0 : index
    %c0_0 = arith.constant 0 : index
    %0 = vector.load %arg1[%c0, %c0_0] : memref<32x64xbf16, #tpu.memory_space<vmem>>, vector<32x64xbf16>
    %c0_1 = arith.constant 0 : index
    %c0_2 = arith.constant 0 : index
    %1 = vector.load %arg2[%c0_1, %c0_2] : memref<64x768xbf16, #tpu.memory_space<vmem>>, vector<64x768xbf16>
    %cst = arith.constant dense<0.000000e+00> : vector<32x768xf32>
    %2 = tpu.matmul %0, %1, %cst {dimension_numbers = #tpu.dot_dimension_numbers<[1], [0], [0], [1], [0, 0, 1, 1], [], []>} : vector<32x64xbf16>, vector<64x768xbf16>, vector<32x768xf32> -> vector<32x768xf32>
    %3 = arith.truncf %2 : vector<32x768xf32> to vector<32x768xbf16>
    %4 = vector.extract_strided_slice %3 {offsets = [0, 0], sizes = [32, 256], strides = [1, 1]} : vector<32x768xbf16> to vector<32x256xbf16>
    %5 = vector.extract_strided_slice %3 {offsets = [0, 256], sizes = [32, 256], strides = [1, 1]} : vector<32x768xbf16> to vector<32x256xbf16>
    %6 = vector.extract_strided_slice %3 {offsets = [0, 512], sizes = [32, 256], strides = [1, 1]} : vector<32x768xbf16> to vector<32x256xbf16>
    %7 = tpu.concatenate %4, %5, %6 in 0 : vector<32x256xbf16>, vector<32x256xbf16>, vector<32x256xbf16> -> vector<96x256xbf16>
    %c0_3 = arith.constant 0 : index
    %c0_4 = arith.constant 0 : index
    %8 = vector.load %arg3[%c0_3, %c0_4] : memref<64x96xbf16, #tpu.memory_space<vmem>>, vector<64x96xbf16>
    %cst_5 = arith.constant dense<0.000000e+00> : vector<64x256xf32>
    %9 = tpu.matmul %8, %7, %cst_5 {dimension_numbers = #tpu.dot_dimension_numbers<[1], [0], [0], [1], [0, 0, 1, 1], [], []>} : vector<64x96xbf16>, vector<96x256xbf16>, vector<64x256xf32> -> vector<64x256xf32>
    %10 = vector.shape_cast %9 : vector<64x256xf32> to vector<2x32x256xf32>
    %11 = vector.extract_strided_slice %10 {offsets = [0, 0, 0], sizes = [2, 32, 128], strides = [1, 1, 1]} : vector<2x32x256xf32> to vector<2x32x128xf32>
    %c0_6 = arith.constant 0 : index
    %c0_7 = arith.constant 0 : index
    %c0_8 = arith.constant 0 : index
    %c0_9 = arith.constant 0 : index
    %12 = vector.load %arg4[%c0_6, %c0_7, %c0_8, %c0_9] : memref<2x2x32x128xf32, #tpu.memory_space<vmem>>, vector<2x1x32x128xf32>
    %13 = vector.shape_cast %12 : vector<2x1x32x128xf32> to vector<2x32x128xf32>
    %14 = vector.shape_cast %11 : vector<2x32x128xf32> to vector<2x1x32x128xf32>
    tpu.vector_store %arg4[%c0_6, %c0_7, %c0_8, %c0_9], %14 {strides = array<i32>} : memref<2x2x32x128xf32, #tpu.memory_space<vmem>>, vector<2x1x32x128xf32>,
    %15 = vector.extract_strided_slice %10 {offsets = [0, 0, 128], sizes = [2, 32, 128], strides = [1, 1, 1]} : vector<2x32x256xf32> to vector<2x32x128xf32>
    %c0_10 = arith.constant 0 : index
    %c1 = arith.constant 1 : index
    %c0_11 = arith.constant 0 : index
    %c0_12 = arith.constant 0 : index
    %16 = vector.load %arg4[%c0_10, %c1, %c0_11, %c0_12] : memref<2x2x32x128xf32, #tpu.memory_space<vmem>>, vector<2x1x32x128xf32>
    %17 = vector.shape_cast %16 : vector<2x1x32x128xf32> to vector<2x32x128xf32>
    %18 = vector.shape_cast %15 : vector<2x32x128xf32> to vector<2x1x32x128xf32>
    tpu.vector_store %arg4[%c0_10, %c1, %c0_11, %c0_12], %18 {strides = array<i32>} : memref<2x2x32x128xf32, #tpu.memory_space<vmem>>, vector<2x1x32x128xf32>,
    return
  }
  func.func @transform_0(%arg0: i32) -> (i32, i32) {
    %c0_i32 = arith.constant 0 : i32
    %c0_i32_0 = arith.constant 0 : i32
    return %arg0, %c0_i32 : i32, i32
  }
  func.func @transform_1(%arg0: i32) -> (i32, i32) {
    %c0_i32 = arith.constant 0 : i32
    %c0_i32_0 = arith.constant 0 : i32
    %c0_i32_1 = arith.constant 0 : i32
    return %c0_i32, %c0_i32_0 : i32, i32
  }
  func.func @transform_2(%arg0: i32) -> (i32, i32) {
    %c0_i32 = arith.constant 0 : i32
    %c0_i32_0 = arith.constant 0 : i32
    %c0_i32_1 = arith.constant 0 : i32
    return %c0_i32, %c0_i32_0 : i32, i32
  }
  func.func @transform_3(%arg0: i32) -> (i32, i32, i32, i32) {
    %c0_i32 = arith.constant 0 : i32
    %c0_i32_0 = arith.constant 0 : i32
    %c0_i32_1 = arith.constant 0 : i32
    %c0_i32_2 = arith.constant 0 : i32
    return %arg0, %c0_i32, %c0_i32_0, %c0_i32_1 : i32, i32, i32, i32
  }
}

</mosaic_0001>

<llo_original>
// kernel: upsampler_forward.1
$region0: #{upsampler_forward.1}
  #allocation0 [shape = 'u32[]', space=smem, size = 0x4, offset = 0x4, fixed_abs, tag = 'smem constant byte address 0x4 - core index']
  #allocation1 [shape = 'u32[144,128]{1,0:T(1,128)}', space=vmem, size = 0x12000, scoped, tag = 'internal scratch']
  %s0 = inlined_call_operand.vmem [shape: bf16[32,64], index: 0, kind: input, shape index: {}]
  %s1 = inlined_call_operand.vmem [shape: bf16[64,768], index: 1, kind: input, shape index: {}]
  %s2 = inlined_call_operand.vmem [shape: bf16[64,96], index: 2, kind: input, shape index: {}]
  %s3 = inlined_call_operand.vmem [shape: f32[2,2,32,128], index: 3, kind: output, shape index: {}]
  %s4 = sld [smem:[#allocation0]]
  $region22: #{upsampler_forward.1} parent=0
    _
  %s6 = ssub.s32 1, %s4
  %s7 = scalar_select 0, %s6, %s4
  // Predicated region
  $region2: #{upsampler_forward.1} parent=0 // pred_check
    _
  $region3: #{upsampler_forward.1} parent=0 // pred_check_branch
    %9 = sbr.rel (0) target = $region5
  $region4: #{upsampler_forward.1} parent=0 // pred_region
    _
  $region5: #{upsampler_forward.1} parent=0 // pred_fallthru
    _
  // Predicated region
  $region6: #{upsampler_forward.1} parent=0 // pred_check
    _
  $region7: #{upsampler_forward.1} parent=0 // pred_check_branch
    %11 = sbr.rel (0) target = $region9
  $region8: #{upsampler_forward.1} parent=0 // pred_region
    _
  $region9: #{upsampler_forward.1} parent=0 // pred_fallthru
    _
  // Predicated region
  $region10: #{upsampler_forward.1} parent=0 // pred_check
    _
  $region11: #{upsampler_forward.1} parent=0 // pred_check_branch
    %13 = sbr.rel (0) target = $region13
  $region12: #{upsampler_forward.1} parent=0 // pred_region
    _
  $region13: #{upsampler_forward.1} parent=0 // pred_fallthru
    _
  %v15 = vld [vmem:[%s0] sm:$0xf]
  %v16 = vld [vmem:[%s0 + $0x4] sm:$0xf]
  %v17 = vld [vmem:[%s0 + $0x8] sm:$0xf]
  %v18 = vld [vmem:[%s0 + $0xc] sm:$0xf]
  %v19 = vld [vmem:[%s1] sm:$0xff]
  %v20 = vld [vmem:[%s1 + $0x8] sm:$0xff]
  %v21 = vld [vmem:[%s1 + $0x10] sm:$0xff]
  %v22 = vld [vmem:[%s1 + $0x18] sm:$0xff]
  %v23 = vld [vmem:[%s1 + $0x20] sm:$0xff]
  %v24 = vld [vmem:[%s1 + $0x28] sm:$0xff]
  %v25 = vld [vmem:[%s1 + $0x30] sm:$0xff]
  %v26 = vld [vmem:[%s1 + $0x38] sm:$0xff]
  %v27 = vld [vmem:[%s1 + $0x40] sm:$0xff]
  %v28 = vld [vmem:[%s1 + $0x48] sm:$0xff]
  %v29 = vld [vmem:[%s1 + $0x50] sm:$0xff]
  %v30 = vld [vmem:[%s1 + $0x58] sm:$0xff]
  %v31 = vld [vmem:[%s1 + $0x60] sm:$0xff]
  %v32 = vld [vmem:[%s1 + $0x68] sm:$0xff]
  %v33 = vld [vmem:[%s1 + $0x70] sm:$0xff]
  %v34 = vld [vmem:[%s1 + $0x78] sm:$0xff]
  %v35 = vld [vmem:[%s1 + $0x80] sm:$0xff]
  %v36 = vld [vmem:[%s1 + $0x88] sm:$0xff]
  %v37 = vld [vmem:[%s1 + $0x90] sm:$0xff]
  %v38 = vld [vmem:[%s1 + $0x98] sm:$0xff]
  %v39 = vld [vmem:[%s1 + $0xa0] sm:$0xff]
  %v40 = vld [vmem:[%s1 + $0xa8] sm:$0xff]
  %v41 = vld [vmem:[%s1 + $0xb0] sm:$0xff]
  %v42 = vld [vmem:[%s1 + $0xb8] sm:$0xff]
  %v47 = vunpack.c.l.b16 %v15
  %v48 = vunpack.c.l.b16 %v16
  %v49 = vunpack.c.l.b16 %v17
  %v50 = vunpack.c.l.b16 %v18
  %v51 = vpack.c.b16 %v48, %v47
  %v52 = vpack.c.b16 %v50, %v49
  %v77 = vunpack.c.l.b16 %v19
  %v78 = vunpack.c.h.b16 %v19
  %v79 = vunpack.c.l.b16 %v20
  %v80 = vunpack.c.h.b16 %v20
  %v81 = vunpack.c.l.b16 %v21
  %v82 = vunpack.c.h.b16 %v21
  %v83 = vunpack.c.l.b16 %v22
  %v84 = vunpack.c.h.b16 %v22
  %v85 = vunpack.c.l.b16 %v23
  %v86 = vunpack.c.h.b16 %v23
  %v87 = vunpack.c.l.b16 %v24
  %v88 = vunpack.c.h.b16 %v24
  %v89 = vunpack.c.l.b16 %v25
  %v90 = vunpack.c.h.b16 %v25
  %v91 = vunpack.c.l.b16 %v26
  %v92 = vunpack.c.h.b16 %v26
  %v93 = vunpack.c.l.b16 %v27
  %v94 = vunpack.c.h.b16 %v27
  %v95 = vunpack.c.l.b16 %v28
  %v96 = vunpack.c.h.b16 %v28
  %v97 = vunpack.c.l.b16 %v29
  %v98 = vunpack.c.h.b16 %v29
  %v99 = vunpack.c.l.b16 %v30
  %v100 = vunpack.c.h.b16 %v30
  %v101 = vunpack.c.l.b16 %v31
  %v102 = vunpack.c.h.b16 %v31
  %v103 = vunpack.c.l.b16 %v32
  %v104 = vunpack.c.h.b16 %v32
  %v105 = vunpack.c.l.b16 %v33
  %v106 = vunpack.c.h.b16 %v33
  %v107 = vunpack.c.l.b16 %v34
  %v108 = vunpack.c.h.b16 %v34
  %v109 = vunpack.c.l.b16 %v35
  %v110 = vunpack.c.h.b16 %v35
  %v111 = vunpack.c.l.b16 %v36
  %v112 = vunpack.c.h.b16 %v36
  %v113 = vunpack.c.l.b16 %v37
  %v114 = vunpack.c.h.b16 %v37
  %v115 = vunpack.c.l.b16 %v38
  %v116 = vunpack.c.h.b16 %v38
  %v117 = vunpack.c.l.b16 %v39
  %v118 = vunpack.c.h.b16 %v39
  %v119 = vunpack.c.l.b16 %v40
  %v120 = vunpack.c.h.b16 %v40
  %v121 = vunpack.c.l.b16 %v41
  %v122 = vunpack.c.h.b16 %v41
  %v123 = vunpack.c.l.b16 %v42
  %v124 = vunpack.c.h.b16 %v42
  %v125 = vpack.c.b16 %v83, %v77
  %v126 = vpack.c.b16 %v84, %v78
  %v127 = vpack.c.b16 %v85, %v79
  %v128 = vpack.c.b16 %v86, %v80
  %v129 = vpack.c.b16 %v87, %v81
  %v130 = vpack.c.b16 %v88, %v82
  %v131 = vpack.c.b16 %v95, %v89
  %v132 = vpack.c.b16 %v96, %v90
  %v133 = vpack.c.b16 %v97, %v91
  %v134 = vpack.c.b16 %v98, %v92
  %v135 = vpack.c.b16 %v99, %v93
  %v136 = vpack.c.b16 %v100, %v94
  %v137 = vpack.c.b16 %v107, %v101
  %v138 = vpack.c.b16 %v108, %v102
  %v139 = vpack.c.b16 %v109, %v103
  %v140 = vpack.c.b16 %v110, %v104
  %v141 = vpack.c.b16 %v111, %v105
  %v142 = vpack.c.b16 %v112, %v106
  %v143 = vpack.c.b16 %v119, %v113
  %v144 = vpack.c.b16 %v120, %v114
  %v145 = vpack.c.b16 %v121, %v115
  %v146 = vpack.c.b16 %v122, %v116
  %v147 = vpack.c.b16 %v123, %v117
  %v148 = vpack.c.b16 %v124, %v118
  %vm173 = vcmask 523264
  %v175 = vsel %vm173, %v51, 0
  %v178 = vsel %vm173, %v52, 0
  %180 = vmatprep.subr.bf16.mxu0 %v126
  %181 = vmatpush1.bf16.msra.mxu0 %v125
  %182 = vmatprep.subr.bf16.mxu0 %v132
  %183 = vmatpush1.bf16.msra.mxu0 %v131
  %184 = vmatprep.subr.bf16.mxu0 %v138
  %185 = vmatpush1.bf16.msra.mxu0 %v137
  %186 = vmatprep.subr.bf16.mxu0 %v144
  %187 = vmatpush1.bf16.msra.mxu0 %v143
  %188 = vmatprep.subr.bf16.mxu0 0
  %189 = vmatpush1.bf16.msra.mxu0 0
  %190 = vmatprep.subr.bf16.mxu0 0
  %191 = vmatpush1.bf16.msra.mxu0 0
  %192 = vmatprep.subr.bf16.mxu0 0
  %193 = vmatpush1.bf16.msra.mxu0 0
  %194 = vmatprep.subr.bf16.mxu0 0
  %195 = vmatpush1.bf16.msra.mxu0 0
  %196 = vmatprep.subr.bf16.mxu0 0
  %197 = vmatpush1.bf16.msra.mxu0 0
  %198 = vmatprep.subr.bf16.mxu0 0
  %199 = vmatpush1.bf16.msra.mxu0 0
  %200 = vmatprep.subr.bf16.mxu0 0
  %201 = vmatpush1.bf16.msra.mxu0 0
  %202 = vmatprep.subr.bf16.mxu0 0
  %203 = vmatpush1.bf16.msra.mxu0 0
  %204 = vmatprep.subr.bf16.mxu0 0
  %205 = vmatpush1.bf16.msra.mxu0 0
  %206 = vmatprep.subr.bf16.mxu0 0
  %207 = vmatpush1.bf16.msra.mxu0 0
  %208 = vmatprep.subr.bf16.mxu0 0
  %209 = vmatpush1.bf16.msra.mxu0 0
  %210 = vmatprep.subr.bf16.mxu0 0
  %211 = vmatpush1.bf16.msra.mxu0 0
  %212 = vmatprep.mubr.bf16.mxu0 0
  %213 = vmatmul.mubr.bf16.gmra.mrb[0].mxu0 %v175
  %v214 = vpop.f32.mrb[0].mxu0
  %v215 = vadd.f32 0.0, %v214
  %v216 = vpop.f32.mrb[0].mxu0
  %v217 = vadd.f32 0.0, %v216
  %v218 = vpop.f32.mrb[0].mxu0
  %v219 = vadd.f32 0.0, %v218
  %v220 = vpop.f32.mrb[0].mxu0
  %v221 = vadd.f32 0.0, %v220
  %222 = vmatprep.mubr.bf16.mxu0 0
  %223 = vmatmul.mubr.bf16.gmra.mrb[0].mxu0 %v178
  %v224 = vpop.f32.mrb[0].mxu0
  %v225 = vadd.f32 0.0, %v224
  %v226 = vpop.f32.mrb[0].mxu0
  %v227 = vadd.f32 0.0, %v226
  %v228 = vpop.f32.mrb[0].mxu0
  %v229 = vadd.f32 0.0, %v228
  %v230 = vpop.f32.mrb[0].mxu0
  %v231 = vadd.f32 0.0, %v230
  %232 = vdwg.mxu0
  %233 = vmatprep.subr.bf16.mxu0 %v128
  %234 = vmatpush1.bf16.msra.mxu0 %v127
  %235 = vmatprep.subr.bf16.mxu0 %v134
  %236 = vmatpush1.bf16.msra.mxu0 %v133
  %237 = vmatprep.subr.bf16.mxu0 %v140
  %238 = vmatpush1.bf16.msra.mxu0 %v139
  %239 = vmatprep.subr.bf16.mxu0 %v146
  %240 = vmatpush1.bf16.msra.mxu0 %v145
  %241 = vmatprep.subr.bf16.mxu0 0
  %242 = vmatpush1.bf16.msra.mxu0 0
  %243 = vmatprep.subr.bf16.mxu0 0
  %244 = vmatpush1.bf16.msra.mxu0 0
  %245 = vmatprep.subr.bf16.mxu0 0
  %246 = vmatpush1.bf16.msra.mxu0 0
  %247 = vmatprep.subr.bf16.mxu0 0
  %248 = vmatpush1.bf16.msra.mxu0 0
  %249 = vmatprep.subr.bf16.mxu0 0
  %250 = vmatpush1.bf16.msra.mxu0 0
  %251 = vmatprep.subr.bf16.mxu0 0
  %252 = vmatpush1.bf16.msra.mxu0 0
  %253 = vmatprep.subr.bf16.mxu0 0
  %254 = vmatpush1.bf16.msra.mxu0 0
  %255 = vmatprep.subr.bf16.mxu0 0
  %256 = vmatpush1.bf16.msra.mxu0 0
  %257 = vmatprep.subr.bf16.mxu0 0
  %258 = vmatpush1.bf16.msra.mxu0 0
  %259 = vmatprep.subr.bf16.mxu0 0
  %260 = vmatpush1.bf16.msra.mxu0 0
  %261 = vmatprep.subr.bf16.mxu0 0
  %262 = vmatpush1.bf16.msra.mxu0 0
  %263 = vmatprep.subr.bf16.mxu0 0
  %264 = vmatpush1.bf16.msra.mxu0 0
  %265 = vmatprep.mubr.bf16.mxu0 0
  %266 = vmatmul.mubr.bf16.gmra.mrb[0].mxu0 %v175
  %v267 = vpop.f32.mrb[0].mxu0
  %v268 = vadd.f32 0.0, %v267
  %v269 = vpop.f32.mrb[0].mxu0
  %v270 = vadd.f32 0.0, %v269
  %v271 = vpop.f32.mrb[0].mxu0
  %v272 = vadd.f32 0.0, %v271
  %v273 = vpop.f32.mrb[0].mxu0
  %v274 = vadd.f32 0.0, %v273
  %275 = vmatprep.mubr.bf16.mxu0 0
  %276 = vmatmul.mubr.bf16.gmra.mrb[0].mxu0 %v178
  %v277 = vpop.f32.mrb[0].mxu0
  %v278 = vadd.f32 0.0, %v277
  %v279 = vpop.f32.mrb[0].mxu0
  %v280 = vadd.f32 0.0, %v279
  %v281 = vpop.f32.mrb[0].mxu0
  %v282 = vadd.f32 0.0, %v281
  %v283 = vpop.f32.mrb[0].mxu0
  %v284 = vadd.f32 0.0, %v283
  %285 = vdwg.mxu0
  %286 = vmatprep.subr.bf16.mxu0 %v130
  %287 = vmatpush1.bf16.msra.mxu0 %v129
  %288 = vmatprep.subr.bf16.mxu0 %v136
  %289 = vmatpush1.bf16.msra.mxu0 %v135
  %290 = vmatprep.subr.bf16.mxu0 %v142
  %291 = vmatpush1.bf16.msra.mxu0 %v141
  %292 = vmatprep.subr.bf16.mxu0 %v148
  %293 = vmatpush1.bf16.msra.mxu0 %v147
  %294 = vmatprep.subr.bf16.mxu0 0
  %295 = vmatpush1.bf16.msra.mxu0 0
  %296 = vmatprep.subr.bf16.mxu0 0
  %297 = vmatpush1.bf16.msra.mxu0 0
  %298 = vmatprep.subr.bf16.mxu0 0
  %299 = vmatpush1.bf16.msra.mxu0 0
  %300 = vmatprep.subr.bf16.mxu0 0
  %301 = vmatpush1.bf16.msra.mxu0 0
  %302 = vmatprep.subr.bf16.mxu0 0
  %303 = vmatpush1.bf16.msra.mxu0 0
  %304 = vmatprep.subr.bf16.mxu0 0
  %305 = vmatpush1.bf16.msra.mxu0 0
  %306 = vmatprep.subr.bf16.mxu0 0
  %307 = vmatpush1.bf16.msra.mxu0 0
  %308 = vmatprep.subr.bf16.mxu0 0
  %309 = vmatpush1.bf16.msra.mxu0 0
  %310 = vmatprep.subr.bf16.mxu0 0
  %311 = vmatpush1.bf16.msra.mxu0 0
  %312 = vmatprep.subr.bf16.mxu0 0
  %313 = vmatpush1.bf16.msra.mxu0 0
  %314 = vmatprep.subr.bf16.mxu0 0
  %315 = vmatpush1.bf16.msra.mxu0 0
  %316 = vmatprep.subr.bf16.mxu0 0
  %317 = vmatpush1.bf16.msra.mxu0 0
  %318 = vmatprep.mubr.bf16.mxu0 0
  %319 = vmatmul.mubr.bf16.gmra.mrb[0].mxu0 %v175
  %v320 = vpop.f32.mrb[0].mxu0
  %v321 = vadd.f32 0.0, %v320
  %v322 = vpop.f32.mrb[0].mxu0
  %v323 = vadd.f32 0.0, %v322
  %v324 = vpop.f32.mrb[0].mxu0
  %v325 = vadd.f32 0.0, %v324
  %v326 = vpop.f32.mrb[0].mxu0
  %v327 = vadd.f32 0.0, %v326
  %328 = vmatprep.mubr.bf16.mxu0 0
  %329 = vmatmul.mubr.bf16.gmra.mrb[0].mxu0 %v178
  %v330 = vpop.f32.mrb[0].mxu0
  %v331 = vadd.f32 0.0, %v330
  %v332 = vpop.f32.mrb[0].mxu0
  %v333 = vadd.f32 0.0, %v332
  %v334 = vpop.f32.mrb[0].mxu0
  %v335 = vadd.f32 0.0, %v334
  %v336 = vpop.f32.mrb[0].mxu0
  %v337 = vadd.f32 0.0, %v336
  %338 = vdwg.mxu0
  %v339 = vpack.c.bf16 %v219, %v215
  %v340 = vpack.c.bf16 %v221, %v217
  %v341 = vpack.c.bf16 %v272, %v268
  %v342 = vpack.c.bf16 %v274, %v270
  %v343 = vpack.c.bf16 %v325, %v321
  %v344 = vpack.c.bf16 %v327, %v323
  %v345 = vpack.c.bf16 %v229, %v225
  %v346 = vpack.c.bf16 %v231, %v227
  %v347 = vpack.c.bf16 %v282, %v278
  %v348 = vpack.c.bf16 %v284, %v280
  %v349 = vpack.c.bf16 %v335, %v331
  %v350 = vpack.c.bf16 %v337, %v333
  %v351 = vld [vmem:[%s2] sm:$0xf]
  %v352 = vld [vmem:[%s2 + $0x4] sm:$0xf]
  %v353 = vld [vmem:[%s2 + $0x8] sm:$0xf]
  %v354 = vld [vmem:[%s2 + $0xc] sm:$0xf]
  %v355 = vld [vmem:[%s2 + $0x10] sm:$0xf]
  %v356 = vld [vmem:[%s2 + $0x14] sm:$0xf]
  %v357 = vld [vmem:[%s2 + $0x18] sm:$0xf]
  %v358 = vld [vmem:[%s2 + $0x1c] sm:$0xf]
  %v367 = vunpack.c.l.b16 %v351
  %v368 = vunpack.c.l.b16 %v352
  %v369 = vunpack.c.l.b16 %v353
  %v370 = vunpack.c.l.b16 %v354
  %v371 = vunpack.c.l.b16 %v355
  %v372 = vunpack.c.l.b16 %v356
  %v373 = vunpack.c.l.b16 %v357
  %v374 = vunpack.c.l.b16 %v358
  %v375 = vpack.c.b16 %v368, %v367
  %v376 = vpack.c.b16 %v370, %v369
  %v377 = vpack.c.b16 %v372, %v371
  %v378 = vpack.c.b16 %v374, %v373
  %vm379 = vcmask 785408
  %v381 = vsel %vm379, %v375, 0
  %v384 = vsel %vm379, %v376, 0
  %v387 = vsel %vm379, %v377, 0
  %v390 = vsel %vm379, %v378, 0
  %392 = vmatprep.subr.bf16.mxu0 %v340
  %393 = vmatpush1.bf16.msra.mxu0 %v339
  %394 = vmatprep.subr.bf16.mxu0 %v346
  %395 = vmatpush1.bf16.msra.mxu0 %v345
  %396 = vmatprep.subr.bf16.mxu0 %v342
  %397 = vmatpush1.bf16.msra.mxu0 %v341
  %398 = vmatprep.subr.bf16.mxu0 %v348
  %399 = vmatpush1.bf16.msra.mxu0 %v347
  %400 = vmatprep.subr.bf16.mxu0 %v344
  %401 = vmatpush1.bf16.msra.mxu0 %v343
  %402 = vmatprep.subr.bf16.mxu0 %v350
  %403 = vmatpush1.bf16.msra.mxu0 %v349
  %404 = vmatprep.subr.bf16.mxu0 0
  %405 = vmatpush1.bf16.msra.mxu0 0
  %406 = vmatprep.subr.bf16.mxu0 0
  %407 = vmatpush1.bf16.msra.mxu0 0
  %408 = vmatprep.subr.bf16.mxu0 0
  %409 = vmatpush1.bf16.msra.mxu0 0
  %410 = vmatprep.subr.bf16.mxu0 0
  %411 = vmatpush1.bf16.msra.mxu0 0
  %412 = vmatprep.subr.bf16.mxu0 0
  %413 = vmatpush1.bf16.msra.mxu0 0
  %414 = vmatprep.subr.bf16.mxu0 0
  %415 = vmatpush1.bf16.msra.mxu0 0
  %416 = vmatprep.subr.bf16.mxu0 0
  %417 = vmatpush1.bf16.msra.mxu0 0
  %418 = vmatprep.subr.bf16.mxu0 0
  %419 = vmatpush1.bf16.msra.mxu0 0
  %420 = vmatprep.subr.bf16.mxu0 0
  %421 = vmatpush1.bf16.msra.mxu0 0
  %422 = vmatprep.subr.bf16.mxu0 0
  %423 = vmatpush1.bf16.msra.mxu0 0
  %424 = vmatprep.mubr.bf16.mxu0 0
  %425 = vmatmul.mubr.bf16.gmra.mrb[0].mxu0 %v381
  %v426 = vpop.f32.mrb[0].mxu0
  %v427 = vadd.f32 0.0, %v426
  %v428 = vpop.f32.mrb[0].mxu0
  %v429 = vadd.f32 0.0, %v428
  %v430 = vpop.f32.mrb[0].mxu0
  %v431 = vadd.f32 0.0, %v430
  %v432 = vpop.f32.mrb[0].mxu0
  %v433 = vadd.f32 0.0, %v432
  %434 = vmatprep.mubr.bf16.mxu0 0
  %435 = vmatmul.mubr.bf16.gmra.mrb[0].mxu0 %v384
  %v436 = vpop.f32.mrb[0].mxu0
  %v437 = vadd.f32 0.0, %v436
  %v438 = vpop.f32.mrb[0].mxu0
  %v439 = vadd.f32 0.0, %v438
  %v440 = vpop.f32.mrb[0].mxu0
  %v441 = vadd.f32 0.0, %v440
  %v442 = vpop.f32.mrb[0].mxu0
  %v443 = vadd.f32 0.0, %v442
  %444 = vmatprep.mubr.bf16.mxu0 0
  %445 = vmatmul.mubr.bf16.gmra.mrb[0].mxu0 %v387
  %v446 = vpop.f32.mrb[0].mxu0
  %v447 = vadd.f32 0.0, %v446
  %v448 = vpop.f32.mrb[0].mxu0
  %v449 = vadd.f32 0.0, %v448
  %v450 = vpop.f32.mrb[0].mxu0
  %v451 = vadd.f32 0.0, %v450
  %v452 = vpop.f32.mrb[0].mxu0
  %v453 = vadd.f32 0.0, %v452
  %454 = vmatprep.mubr.bf16.mxu0 0
  %455 = vmatmul.mubr.bf16.gmra.mrb[0].mxu0 %v390
  %v456 = vpop.f32.mrb[0].mxu0
  %v457 = vadd.f32 0.0, %v456
  %v458 = vpop.f32.mrb[0].mxu0
  %v459 = vadd.f32 0.0, %v458
  %v460 = vpop.f32.mrb[0].mxu0
  %v461 = vadd.f32 0.0, %v460
  %v462 = vpop.f32.mrb[0].mxu0
  %v463 = vadd.f32 0.0, %v462
  %464 = vdwg.mxu0
  %465 = vst [vmem:[%s3] sm:$0xff] %v427
  %466 = vst [vmem:[%s3 + $0x8] sm:$0xff] %v431
  %467 = vst [vmem:[%s3 + $0x10] sm:$0xff] %v437
  %468 = vst [vmem:[%s3 + $0x18] sm:$0xff] %v441
  %469 = vst [vmem:[%s3 + $0x40] sm:$0xff] %v447
  %470 = vst [vmem:[%s3 + $0x48] sm:$0xff] %v451
  %471 = vst [vmem:[%s3 + $0x50] sm:$0xff] %v457
  %472 = vst [vmem:[%s3 + $0x58] sm:$0xff] %v461
  %s473 = scalar_lea.vmem %s3, 32
  %474 = vst [vmem:[%s473] sm:$0xff] %v429
  %475 = vst [vmem:[%s473 + $0x8] sm:$0xff] %v433
  %476 = vst [vmem:[%s473 + $0x10] sm:$0xff] %v439
  %477 = vst [vmem:[%s473 + $0x18] sm:$0xff] %v443
  %478 = vst [vmem:[%s473 + $0x40] sm:$0xff] %v449
  %479 = vst [vmem:[%s473 + $0x48] sm:$0xff] %v453
  %480 = vst [vmem:[%s473 + $0x50] sm:$0xff] %v459
  %481 = vst [vmem:[%s473 + $0x58] sm:$0xff] %v463
  // Predicated region
  $region14: #{upsampler_forward.1} parent=0 // pred_check
    _
  $region15: #{upsampler_forward.1} parent=0 // pred_check_branch
    %483 = sbr.rel (0) target = $region17
  $region16: #{upsampler_forward.1} parent=0 // pred_region
    _
  $region17: #{upsampler_forward.1} parent=0 // pred_fallthru
    _
  // Predicated region
  $region18: #{upsampler_forward.1} parent=0 // pred_check
    _
  $region19: #{upsampler_forward.1} parent=0 // pred_check_branch
    %485 = sbr.rel (0) target = $region21
  $region20: #{upsampler_forward.1} parent=0 // pred_region
    _
  $region21: #{upsampler_forward.1} parent=0 // pred_fallthru
    _

</llo_original>
